<compile_context>
chip_gen: v7x
topology: tpu7x:2x2x1
jax: 0.10.0
libtpu: 0.0.40
codegen_flags: <defaults>
</compile_context>

<pallas_src>
import math
import functools

import jax
import jax.numpy as jnp
from jax import lax
from jax.experimental import pallas as pl
from jax.experimental.pallas import tpu as pltpu


# ---------------------------------------------------------------------------
# Fused QKV projection + causal flash attention, one (batch, q-tile) per step
# ---------------------------------------------------------------------------
def _fused_attention_kernel(x_ref, wq_ref, wk_ref, wv_ref, o_ref,
                            m_ref, l_ref, acc_ref, *, tq, tk, mxu_dtype):
    qi = pl.program_id(1)

    # Fresh online-softmax state for every grid step (scratch persists
    # across grid iterations, so initialize unconditionally).
    m_ref[...] = jnp.full(m_ref.shape, -jnp.inf, dtype=m_ref.dtype)
    l_ref[...] = jnp.zeros(l_ref.shape, dtype=l_ref.dtype)
    acc_ref[...] = jnp.zeros(acc_ref.shape, dtype=acc_ref.dtype)

    # Tiny weights, hoisted loads (1/sqrt(H) already folded into wq).
    wq = wq_ref[...]                         # (C, H) bf16
    wk = wk_ref[...]                         # (C, H) bf16
    wv = wv_ref[...]                         # (C, H) bf16

    # Project this q-tile directly from the resident x row (no HBM q array).
    q_off = pl.multiple_of(qi * tq, tq)
    xq = x_ref[0, pl.ds(q_off, tq), :]       # (tq, C) bf16
    q = jnp.dot(xq, wq,
                preferred_element_type=jnp.float32).astype(mxu_dtype)

    # Static causal mask for the diagonal chunk (tq == tk by construction).
    row = lax.broadcasted_iota(jnp.int32, (tq, tk), 0)
    col = lax.broadcasted_iota(jnp.int32, (tq, tk), 1)
    causal = col <= row

    # In-kernel reduction over exactly the causally visible KV chunks
    # (0..qi): no skipped grid steps, no K/V HBM re-reads.
    @pl.loop(0, qi + 1)
    def _kv_step(j):
        k_off = pl.multiple_of(j * tk, tk)
        xk = x_ref[0, pl.ds(k_off, tk), :]                        # (tk, C)
        k = jnp.dot(xk, wk,
                    preferred_element_type=jnp.float32).astype(mxu_dtype)
        v = jnp.dot(xk, wv,
                    preferred_element_type=jnp.float32).astype(mxu_dtype)

        # QK^T contracting on H directly (no transpose); scale pre-folded.
        s = lax.dot_general(q, k, (((1,), (1,)), ((), ())),
                            preferred_element_type=jnp.float32)   # (tq, tk)
        # Only the diagonal chunk (j == qi) is actually masked.
        s = jnp.where(causal | (j < qi), s, -jnp.inf)

        m_prev = m_ref[...]                                       # (tq, 1)
        m_new = jnp.maximum(m_prev, jnp.max(s, axis=-1, keepdims=True))
        alpha = jnp.exp(m_prev - m_new)
        p = jnp.exp(s - m_new)                                    # (tq, tk) f32
        l_ref[...] = alpha * l_ref[...] + jnp.sum(p, axis=-1, keepdims=True)
        acc_ref[...] = alpha * acc_ref[...] + jnp.dot(
            p.astype(mxu_dtype), v, preferred_element_type=jnp.float32)
        m_ref[...] = m_new

    # Exact normalization, once per q-tile.  (H=16 output store is the only
    # remaining lane-sparse access; forced by the module's output shape.)
    o_ref[0] = (acc_ref[...] / l_ref[...]).astype(o_ref.dtype)


def attention_forward(x, wq, wk, wv, *, block_q=256, mxu_dtype=jnp.bfloat16):
    """x: (B, T, C); wq/wk/wv: PyTorch nn.Linear weights of shape (H, C)."""
    B, T, C = x.shape
    H = wq.shape[0]

    tq = min(block_q, T)
    assert T % tq == 0, "T must be divisible by the q-tile size"
    assert tq % 8 == 0 or tq == T, "q tile must satisfy sublane alignment"
    tk = tq  # square tiles: diagonal-chunk masking assumes aligned tiles

    # Fold the 1/sqrt(H) scale into Wq (one-time constant fold).
    scale = 1.0 / math.sqrt(H)
    wq_s = (wq.T * scale).astype(mxu_dtype)          # (C, H)
    wk_t = wk.T.astype(mxu_dtype)                    # (C, H)
    wv_t = wv.T.astype(mxu_dtype)                    # (C, H)
    x_c = x.astype(mxu_dtype)                        # (B, T, C)

    # Headroom below v7x's 64 MiB physical VMEM; raises v5e/v6e defaults.
    vmem_limit = 48 * 1024 * 1024

    kernel = functools.partial(_fused_attention_kernel,
                               tq=tq, tk=tk, mxu_dtype=mxu_dtype)

    return pl.pallas_call(
        kernel,
        out_shape=jax.ShapeDtypeStruct((B, T, H), x.dtype),
        grid_spec=pltpu.PrefetchScalarGridSpec(
            num_scalar_prefetch=0,
            grid=(B, T // tq),
            in_specs=[
                # Whole (T, C) row of x per batch; index_map depends only on
                # b, so the block is revisited (no new DMA) across q-tiles.
                pl.BlockSpec((1, T, C), lambda b, qi: (b, 0, 0)),
                pl.BlockSpec((C, H), lambda b, qi: (0, 0)),
                pl.BlockSpec((C, H), lambda b, qi: (0, 0)),
                pl.BlockSpec((C, H), lambda b, qi: (0, 0)),
            ],
            out_specs=pl.BlockSpec((1, tq, H), lambda b, qi: (b, qi, 0)),
            scratch_shapes=[
                pltpu.VMEM((tq, 1), jnp.float32),    # running max
                pltpu.VMEM((tq, 1), jnp.float32),    # running sum
                pltpu.VMEM((tq, H), jnp.float32),    # output accumulator
            ],
        ),
        compiler_params=pltpu.CompilerParams(
            dimension_semantics=("parallel", "parallel"),
            vmem_limit_bytes=vmem_limit),
    )(x_c, wq_s, wk_t, wv_t)


def attention_reference(x, wq, wk, wv):
    """Pure-JAX f32 reference mirroring the PyTorch forward (eval dropout)."""
    B, T, C = x.shape
    H = wq.shape[0]
    q = x @ wq.T
    k = x @ wk.T
    v = x @ wv.T
    weights = (q @ jnp.swapaxes(k, -2, -1)) / math.sqrt(H)
    mask = jnp.tril(jnp.ones((T, T), dtype=x.dtype))
    weights = jnp.where(mask == 0, -jnp.inf, weights)
    weights = jax.nn.softmax(weights, axis=-1)
    return weights @ v


if __name__ == "__main__":
    # module hyper-params
    d_model = 32
    head_size = 16
    context_length = 8
    dropout = 0.1  # identity in this deterministic (eval-mode) implementation

    B, T, C = 2, context_length, d_model

    key = jax.random.PRNGKey(0)
    kx, kq, kk, kv = jax.random.split(key, 4)

    x = jax.random.normal(kx, (B, T, C), dtype=jnp.float32)
    init_scale = 1.0 / math.sqrt(d_model)
    Wq = jax.random.uniform(kq, (head_size, d_model), jnp.float32,
                            -init_scale, init_scale)
    Wk = jax.random.uniform(kk, (head_size, d_model), jnp.float32,
                            -init_scale, init_scale)
    Wv = jax.random.uniform(kv, (head_size, d_model), jnp.float32,
                            -init_scale, init_scale)

    out = attention_forward(x, Wq, Wk, Wv)
    out = jax.block_until_ready(out)

    ref = attention_reference(x, Wq, Wk, Wv)
    assert out.shape == (B, T, head_size), out.shape
    # bf16 MXU operands vs. a pure-f32 reference: loose-but-safe tolerance.
    max_err = float(jnp.max(jnp.abs(out.astype(jnp.float32) - ref)))
    assert jnp.allclose(out.astype(jnp.float32), ref, atol=3e-2, rtol=3e-2), max_err

    print("KERNEL_OK")
</pallas_src>

<mosaic_0001>
module attributes {stable_mosaic.version = 11 : i64} {
  func.func @_fused_attention_kernel(%arg0: i32, %arg1: i32, %arg2: memref<1x8x32xbf16, #tpu.memory_space<vmem>>, %arg3: memref<32x16xbf16, #tpu.memory_space<vmem>>, %arg4: memref<32x16xbf16, #tpu.memory_space<vmem>>, %arg5: memref<32x16xbf16, #tpu.memory_space<vmem>>, %arg6: memref<1x8x16xf32, #tpu.memory_space<vmem>>, %arg7: memref<8x1xf32, #tpu.memory_space<vmem>>, %arg8: memref<8x1xf32, #tpu.memory_space<vmem>>, %arg9: memref<8x16xf32, #tpu.memory_space<vmem>>) attributes {dimension_semantics = [#tpu.dimension_semantics<parallel>, #tpu.dimension_semantics<parallel>], iteration_bounds = array<i64: 2, 1>, scalar_prefetch = 0 : i64, scratch_operands = 3 : i64, tpu.core_type = #tpu.core_type<tc>, window_params = [{transform_indices = @transform_0, window_bounds = array<i64: 1, 8, 32>}, {pipeline_mode = #tpu.pipeline_mode<synchronous>, transform_indices = @transform_1, window_bounds = array<i64: 32, 16>}, {pipeline_mode = #tpu.pipeline_mode<synchronous>, transform_indices = @transform_2, window_bounds = array<i64: 32, 16>}, {pipeline_mode = #tpu.pipeline_mode<synchronous>, transform_indices = @transform_3, window_bounds = array<i64: 32, 16>}, {transform_indices = @transform_4, window_bounds = array<i64: 1, 8, 16>}]} {
    %cst = arith.constant 0xFF800000 : f32
    %0 = vector.broadcast %cst : f32 to vector<8x1xf32>
    %c0 = arith.constant 0 : index
    %c0_0 = arith.constant 0 : index
    %1 = vector.load %arg7[%c0, %c0_0] : memref<8x1xf32, #tpu.memory_space<vmem>>, vector<8x1xf32>
    tpu.vector_store %arg7[%c0, %c0_0], %0 {strides = array<i32>} : memref<8x1xf32, #tpu.memory_space<vmem>>, vector<8x1xf32>,
    %cst_1 = arith.constant 0.000000e+00 : f32
    %2 = vector.broadcast %cst_1 : f32 to vector<8x1xf32>
    %c0_2 = arith.constant 0 : index
    %c0_3 = arith.constant 0 : index
    %3 = vector.load %arg8[%c0_2, %c0_3] : memref<8x1xf32, #tpu.memory_space<vmem>>, vector<8x1xf32>
    tpu.vector_store %arg8[%c0_2, %c0_3], %2 {strides = array<i32>} : memref<8x1xf32, #tpu.memory_space<vmem>>, vector<8x1xf32>,
    %cst_4 = arith.constant 0.000000e+00 : f32
    %4 = vector.broadcast %cst_4 : f32 to vector<8x16xf32>
    %c0_5 = arith.constant 0 : index
    %c0_6 = arith.constant 0 : index
    %5 = vector.load %arg9[%c0_5, %c0_6] : memref<8x16xf32, #tpu.memory_space<vmem>>, vector<8x16xf32>
    tpu.vector_store %arg9[%c0_5, %c0_6], %4 {strides = array<i32>} : memref<8x16xf32, #tpu.memory_space<vmem>>, vector<8x16xf32>,
    %c0_7 = arith.constant 0 : index
    %c0_8 = arith.constant 0 : index
    %6 = vector.load %arg3[%c0_7, %c0_8] : memref<32x16xbf16, #tpu.memory_space<vmem>>, vector<32x16xbf16>
    %c0_9 = arith.constant 0 : index
    %c0_10 = arith.constant 0 : index
    %7 = vector.load %arg4[%c0_9, %c0_10] : memref<32x16xbf16, #tpu.memory_space<vmem>>, vector<32x16xbf16>
    %c0_11 = arith.constant 0 : index
    %c0_12 = arith.constant 0 : index
    %8 = vector.load %arg5[%c0_11, %c0_12] : memref<32x16xbf16, #tpu.memory_space<vmem>>, vector<32x16xbf16>
    %c8_i32 = arith.constant 8 : i32
    %9 = arith.muli %arg1, %c8_i32 : i32
    %10 = tpu.assume_multiple %9, 8 : i32
    %c0_13 = arith.constant 0 : index
    %11 = arith.index_cast %10 : i32 to index
    %c0_14 = arith.constant 0 : index
    %12 = vector.load %arg2[%c0_13, %11, %c0_14] : memref<1x8x32xbf16, #tpu.memory_space<vmem>>, vector<1x8x32xbf16>
    %13 = vector.shape_cast %12 : vector<1x8x32xbf16> to vector<8x32xbf16>
    %cst_15 = arith.constant dense<0.000000e+00> : vector<8x16xf32>
    %14 = tpu.matmul %13, %6, %cst_15 {dimension_numbers = #tpu.dot_dimension_numbers<[1], [0], [0], [1], [0, 0, 1, 1], [], []>} : vector<8x32xbf16>, vector<32x16xbf16>, vector<8x16xf32> -> vector<8x16xf32>
    %15 = arith.truncf %14 : vector<8x16xf32> to vector<8x16xbf16>
    %16 = tpu.iota {dimensions = array<i32: 0>} : vector<8x8xi32>
    %17 = tpu.iota {dimensions = array<i32: 1>} : vector<8x8xi32>
    %18 = arith.cmpi sle, %17, %16 : vector<8x8xi32>
    %c1_i32 = arith.constant 1 : i32
    %19 = arith.addi %arg1, %c1_i32 : i32
    %c0_i32 = arith.constant 0 : i32
    %20 = arith.subi %19, %c0_i32 : i32
    %c1_i32_16 = arith.constant 1 : i32
    %c1_i32_17 = arith.constant 1 : i32
    %21 = arith.subi %c1_i32_16, %c1_i32_17 : i32
    %22 = arith.addi %20, %21 : i32
    %c1_i32_18 = arith.constant 1 : i32
    %23 = arith.divsi %22, %c1_i32_18 : i32
    %c1_i32_19 = arith.constant 1 : i32
    %c0_i32_20 = arith.constant 0 : i32
    %c0_i32_21 = arith.constant 0 : i32
    %24 = arith.subi %23, %c0_i32_21 : i32
    %25 = arith.addi %c0_i32_21, %24 : i32
    %c1_i32_22 = arith.constant 1 : i32
    scf.for %arg10 = %c0_i32_21 to %25 step %c1_i32_22  : i32 {
      %33 = arith.muli %arg10, %c1_i32_19 : i32
      %34 = arith.addi %c0_i32_20, %33 : i32
      %c8_i32_30 = arith.constant 8 : i32
      %35 = arith.muli %34, %c8_i32_30 : i32
      %36 = tpu.assume_multiple %35, 8 : i32
      %c0_31 = arith.constant 0 : index
      %37 = arith.index_cast %36 : i32 to index
      %c0_32 = arith.constant 0 : index
      %38 = vector.load %arg2[%c0_31, %37, %c0_32] : memref<1x8x32xbf16, #tpu.memory_space<vmem>>, vector<1x8x32xbf16>
      %39 = vector.shape_cast %38 : vector<1x8x32xbf16> to vector<8x32xbf16>
      %cst_33 = arith.constant dense<0.000000e+00> : vector<8x16xf32>
      %40 = tpu.matmul %39, %7, %cst_33 {dimension_numbers = #tpu.dot_dimension_numbers<[1], [0], [0], [1], [0, 0, 1, 1], [], []>} : vector<8x32xbf16>, vector<32x16xbf16>, vector<8x16xf32> -> vector<8x16xf32>
      %41 = arith.truncf %40 : vector<8x16xf32> to vector<8x16xbf16>
      %cst_34 = arith.constant dense<0.000000e+00> : vector<8x16xf32>
      %42 = tpu.matmul %39, %8, %cst_34 {dimension_numbers = #tpu.dot_dimension_numbers<[1], [0], [0], [1], [0, 0, 1, 1], [], []>} : vector<8x32xbf16>, vector<32x16xbf16>, vector<8x16xf32> -> vector<8x16xf32>
      %43 = arith.truncf %42 : vector<8x16xf32> to vector<8x16xbf16>
      %cst_35 = arith.constant dense<0.000000e+00> : vector<8x8xf32>
      %44 = tpu.matmul %15, %41, %cst_35 {dimension_numbers = #tpu.dot_dimension_numbers<[1], [1], [0], [0], [0, 0, 1, 0], [], []>} : vector<8x16xbf16>, vector<8x16xbf16>, vector<8x8xf32> -> vector<8x8xf32>
      %45 = arith.cmpi slt, %34, %arg1 : i32
      %46 = vector.broadcast %45 : i1 to vector<8x8xi1>
      %47 = arith.ori %18, %46 : vector<8x8xi1>
      %cst_36 = arith.constant 0xFF800000 : f32
      %48 = vector.broadcast %cst_36 : f32 to vector<8x8xf32>
      %49 = arith.select %47, %44, %48 : vector<8x8xi1>, vector<8x8xf32>
      %c0_37 = arith.constant 0 : index
      %c0_38 = arith.constant 0 : index
      %50 = vector.load %arg7[%c0_37, %c0_38] : memref<8x1xf32, #tpu.memory_space<vmem>>, vector<8x1xf32>
      %cst_39 = arith.constant dense<0xFF800000> : vector<8xf32>
      %51 = vector.multi_reduction <maximumf>, %49, %cst_39 [1] : vector<8x8xf32> to vector<8xf32>
      %52 = vector.shape_cast %51 : vector<8xf32> to vector<8x1xf32>
      %53 = arith.maximumf %50, %52 : vector<8x1xf32>
      %54 = arith.subf %50, %53 : vector<8x1xf32>
      %55 = math.exp %54 : vector<8x1xf32>
      %56 = vector.broadcast %53 : vector<8x1xf32> to vector<8x8xf32>
      %57 = arith.subf %49, %56 : vector<8x8xf32>
      %58 = math.exp %57 : vector<8x8xf32>
      %c0_40 = arith.constant 0 : index
      %c0_41 = arith.constant 0 : index
      %59 = vector.load %arg8[%c0_40, %c0_41] : memref<8x1xf32, #tpu.memory_space<vmem>>, vector<8x1xf32>
      %60 = arith.mulf %55, %59 : vector<8x1xf32>
      %cst_42 = arith.constant dense<0.000000e+00> : vector<8xf32>
      %61 = vector.multi_reduction <add>, %58, %cst_42 [1] : vector<8x8xf32> to vector<8xf32>
      %62 = vector.shape_cast %61 : vector<8xf32> to vector<8x1xf32>
      %63 = arith.addf %60, %62 : vector<8x1xf32>
      %c0_43 = arith.constant 0 : index
      %c0_44 = arith.constant 0 : index
      %64 = vector.load %arg8[%c0_43, %c0_44] : memref<8x1xf32, #tpu.memory_space<vmem>>, vector<8x1xf32>
      tpu.vector_store %arg8[%c0_43, %c0_44], %63 {strides = array<i32>} : memref<8x1xf32, #tpu.memory_space<vmem>>, vector<8x1xf32>,
      %c0_45 = arith.constant 0 : index
      %c0_46 = arith.constant 0 : index
      %65 = vector.load %arg9[%c0_45, %c0_46] : memref<8x16xf32, #tpu.memory_space<vmem>>, vector<8x16xf32>
      %66 = vector.broadcast %55 : vector<8x1xf32> to vector<8x16xf32>
      %67 = arith.mulf %66, %65 : vector<8x16xf32>
      %68 = arith.truncf %58 : vector<8x8xf32> to vector<8x8xbf16>
      %cst_47 = arith.constant dense<0.000000e+00> : vector<8x16xf32>
      %69 = tpu.matmul %68, %43, %cst_47 {dimension_numbers = #tpu.dot_dimension_numbers<[1], [0], [0], [1], [0, 0, 1, 1], [], []>} : vector<8x8xbf16>, vector<8x16xbf16>, vector<8x16xf32> -> vector<8x16xf32>
      %70 = arith.addf %67, %69 : vector<8x16xf32>
      %c0_48 = arith.constant 0 : index
      %c0_49 = arith.constant 0 : index
      %71 = vector.load %arg9[%c0_48, %c0_49] : memref<8x16xf32, #tpu.memory_space<vmem>>, vector<8x16xf32>
      tpu.vector_store %arg9[%c0_48, %c0_49], %70 {strides = array<i32>} : memref<8x16xf32, #tpu.memory_space<vmem>>, vector<8x16xf32>,
      %c0_50 = arith.constant 0 : index
      %c0_51 = arith.constant 0 : index
      %72 = vector.load %arg7[%c0_50, %c0_51] : memref<8x1xf32, #tpu.memory_space<vmem>>, vector<8x1xf32>
      tpu.vector_store %arg7[%c0_50, %c0_51], %53 {strides = array<i32>} : memref<8x1xf32, #tpu.memory_space<vmem>>, vector<8x1xf32>,
    }
    %c0_23 = arith.constant 0 : index
    %c0_24 = arith.constant 0 : index
    %26 = vector.load %arg9[%c0_23, %c0_24] : memref<8x16xf32, #tpu.memory_space<vmem>>, vector<8x16xf32>
    %c0_25 = arith.constant 0 : index
    %c0_26 = arith.constant 0 : index
    %27 = vector.load %arg8[%c0_25, %c0_26] : memref<8x1xf32, #tpu.memory_space<vmem>>, vector<8x1xf32>
    %28 = vector.broadcast %27 : vector<8x1xf32> to vector<8x16xf32>
    %29 = arith.divf %26, %28 : vector<8x16xf32>
    %c0_27 = arith.constant 0 : index
    %c0_28 = arith.constant 0 : index
    %c0_29 = arith.constant 0 : index
    %30 = vector.load %arg6[%c0_27, %c0_28, %c0_29] : memref<1x8x16xf32, #tpu.memory_space<vmem>>, vector<1x8x16xf32>
    %31 = vector.shape_cast %30 : vector<1x8x16xf32> to vector<8x16xf32>
    %32 = vector.shape_cast %29 : vector<8x16xf32> to vector<1x8x16xf32>
    tpu.vector_store %arg6[%c0_27, %c0_28, %c0_29], %32 {strides = array<i32>} : memref<1x8x16xf32, #tpu.memory_space<vmem>>, vector<1x8x16xf32>,
    return
  }
  func.func @transform_0(%arg0: i32, %arg1: i32) -> (i32, i32, i32) {
    %c0_i32 = arith.constant 0 : i32
    %c0_i32_0 = arith.constant 0 : i32
    %c0_i32_1 = arith.constant 0 : i32
    return %arg0, %c0_i32, %c0_i32_0 : i32, i32, i32
  }
  func.func @transform_1(%arg0: i32, %arg1: i32) -> (i32, i32) {
    %c0_i32 = arith.constant 0 : i32
    %c0_i32_0 = arith.constant 0 : i32
    %c0_i32_1 = arith.constant 0 : i32
    return %c0_i32, %c0_i32_0 : i32, i32
  }
  func.func @transform_2(%arg0: i32, %arg1: i32) -> (i32, i32) {
    %c0_i32 = arith.constant 0 : i32
    %c0_i32_0 = arith.constant 0 : i32
    %c0_i32_1 = arith.constant 0 : i32
    return %c0_i32, %c0_i32_0 : i32, i32
  }
  func.func @transform_3(%arg0: i32, %arg1: i32) -> (i32, i32) {
    %c0_i32 = arith.constant 0 : i32
    %c0_i32_0 = arith.constant 0 : i32
    %c0_i32_1 = arith.constant 0 : i32
    return %c0_i32, %c0_i32_0 : i32, i32
  }
  func.func @transform_4(%arg0: i32, %arg1: i32) -> (i32, i32, i32) {
    %c0_i32 = arith.constant 0 : i32
    %c0_i32_0 = arith.constant 0 : i32
    return %arg0, %arg1, %c0_i32 : i32, i32, i32
  }
}

</mosaic_0001>

<llo_original>
// kernel: tpu_custom_call.1
$region0: #{tpu_custom_call.1}
  #allocation0 [shape = 'u32[]', space=smem, size = 0x4, offset = 0x4, fixed_abs, tag = 'smem constant byte address 0x4 - core index']
  #allocation1 [shape = 'u32[144,128]{1,0:T(1,128)}', space=vmem, size = 0x12000, scoped, tag = 'internal scratch']
  #allocation2 [shape = 'f32[8,1]{1,0:T(8,128)}', space=vmem, size = 0x1000, scoped, tag = 'scratch operand']
  #allocation3 [shape = 'f32[8,1]{1,0:T(8,128)}', space=vmem, size = 0x1000, scoped, tag = 'scratch operand']
  #allocation4 [shape = 'f32[8,16]{1,0:T(8,128)}', space=vmem, size = 0x1000, scoped, tag = 'scratch operand']
  %s0 = inlined_call_operand.vmem [shape: bf16[2,8,32], index: 0, kind: input, shape index: {}]
  %s1 = inlined_call_operand.vmem [shape: bf16[32,16], index: 1, kind: input, shape index: {}]
  %s2 = inlined_call_operand.vmem [shape: bf16[32,16], index: 2, kind: input, shape index: {}]
  %s3 = inlined_call_operand.vmem [shape: bf16[32,16], index: 3, kind: input, shape index: {}]
  %s4 = inlined_call_operand.hbm [shape: f32[2,8,16], index: 4, kind: output, shape index: {}]
  %s5 = sld [smem:[#allocation0]]
  $region56: #{tpu_custom_call.1} parent=0
    _
  %s7 = ssub.s32 1, %s5
  %s8 = scalar_select 0, %s7, %s5
  $region1: #{tpu_custom_call.1} parent=0
    #allocation5 [shape = 'u8[8192]{0}', space=vmem, size = 0x2000, scoped, tag = 'output window, operand 0']
    #allocation6 [shape = 's32[2]{0}', space=sflag, size = 0x8, scoped, tag = 'scoped memory for tpu_custom_call.1']
    %9 = vsyncpa [#allocation6], 0
    %s10 = scalar_lea.sflag [#allocation6], 1
    %11 = vsyncpa %s10, 0
    loop: start=0, step=1, limit=4
    $region2: #{tpu_custom_call.1} parent=1 // loop_pre_header
      _
    $region3: #{tpu_custom_call.1} parent=1 // loop_header
      %s13 = sphi 0, %s17
      %p14 = scmp.ge.s32.totalorder %s13, 4
      %s20 = sphi 0, %s32
      %s21 = sphi 0, %s28
      %s22 = sphi 0, %s20
      %s23 = sphi 0, %s21
      %s24 = sphi 0, %s22
      %s25 = sphi 0, %s23
      %s35 = sphi 0, %s37
      %s38 = sphi 0, %s35
      %s39 = sphi 0, %s38
      %s55 = sphi 0, %s39
      %s59 = sphi 0, %s59
      %s61 = sphi 0, %s59
      %s62 = sphi 0, %s61
      %s76 = sphi 0, %s62
      %s80 = sphi 0, %s80
      %s82 = sphi 0, %s80
      %s83 = sphi 0, %s82
      %s97 = sphi 0, %s83
      %s101 = sphi 0, %s101
      %s103 = sphi 0, %s101
      %s104 = sphi 0, %s103
      %s118 = sphi 0, %s104
      %s126 = sphi 0, %s128
      %s129 = sphi 0, %s126
      %s130 = sphi 0, %s129
      %s146 = sphi 0, %s130
    $region4: #{tpu_custom_call.1} parent=1 // loop_header_branch
      %16 = sbr.rel (%p14) target = $region8
    $region5: #{tpu_custom_call.1} parent=1 // loop_body
      %s18 = ssub.s32 %s13, 1
      %s19 = ssub.s32 %s13, 2
      %s26 = sadd.s32 1, %s21
      %p27 = scmp.ge.s32.totalorder %s26, 1
      %s28 = scalar_select %p27, 0, %s26
      %s29 = sadd.s32 1, %s20
      %s30 = scalar_select %p27, %s29, %s20
      %p31 = scmp.ge.s32.totalorder %s30, 2
      %s32 = scalar_select %p31, 0, %s30
      %s33 = ssub.s32 %s20, %s32
      %p34 = scmp.eq.s32.totalorder %s33, 0
      %s36 = sadd.s32 %s35, 1
      %s37 = scalar_select %p34, %s35, %s36
      %p40 = pneg %p34
      %p41 = scmp.eq.s32.totalorder %s13, 1
      %p42 = por %p40, %p41
      %p43 = scmp.ne.s32.totalorder %s35, %s38
      %p44 = scmp.eq.s32.totalorder %s13, 0
      %p45 = por %p43, %p44
      %p46 = scmp.ne.s32.totalorder %s35, %s38
      %p47 = scmp.eq.s32.totalorder %s18, 1
      %p48 = por %p46, %p47
      %p49 = scmp.ne.s32.totalorder %s38, %s39
      %p50 = scmp.eq.s32.totalorder %s18, 0
      %p51 = por %p49, %p50
      %p52 = scmp.ne.s32.totalorder %s38, %s39
      %p53 = scmp.eq.s32.totalorder %s19, 1
      %p54 = por %p52, %p53
      %p56 = scmp.ne.s32.totalorder %s39, %s55
      %p57 = scmp.eq.s32.totalorder %s19, 0
      %p58 = por %p56, %p57
      %s60 = sadd.s32 %s59, 1
      %p63 = scmp.eq.s32.totalorder %s13, 1
      %p64 = scmp.ne.s32.totalorder %s59, %s61
      %p65 = scmp.eq.s32.totalorder %s13, 0
      %p66 = por %p64, %p65
      %p67 = scmp.ne.s32.totalorder %s59, %s61
      %p68 = scmp.eq.s32.totalorder %s18, 1
      %p69 = por %p67, %p68
      %p70 = scmp.ne.s32.totalorder %s61, %s62
      %p71 = scmp.eq.s32.totalorder %s18, 0
      %p72 = por %p70, %p71
      %p73 = scmp.ne.s32.totalorder %s61, %s62
      %p74 = scmp.eq.s32.totalorder %s19, 1
      %p75 = por %p73, %p74
      %p77 = scmp.ne.s32.totalorder %s62, %s76
      %p78 = scmp.eq.s32.totalorder %s19, 0
      %p79 = por %p77, %p78
      %s81 = sadd.s32 %s80, 1
      %p84 = scmp.eq.s32.totalorder %s13, 1
      %p85 = scmp.ne.s32.totalorder %s80, %s82
      %p86 = scmp.eq.s32.totalorder %s13, 0
      %p87 = por %p85, %p86
      %p88 = scmp.ne.s32.totalorder %s80, %s82
      %p89 = scmp.eq.s32.totalorder %s18, 1
      %p90 = por %p88, %p89
      %p91 = scmp.ne.s32.totalorder %s82, %s83
      %p92 = scmp.eq.s32.totalorder %s18, 0
      %p93 = por %p91, %p92
      %p94 = scmp.ne.s32.totalorder %s82, %s83
      %p95 = scmp.eq.s32.totalorder %s19, 1
      %p96 = por %p94, %p95
      %p98 = scmp.ne.s32.totalorder %s83, %s97
      %p99 = scmp.eq.s32.totalorder %s19, 0
      %p100 = por %p98, %p99
      %s102 = sadd.s32 %s101, 1
      %p105 = scmp.eq.s32.totalorder %s13, 1
      %p106 = scmp.ne.s32.totalorder %s101, %s103
      %p107 = scmp.eq.s32.totalorder %s13, 0
      %p108 = por %p106, %p107
      %p109 = scmp.ne.s32.totalorder %s101, %s103
      %p110 = scmp.eq.s32.totalorder %s18, 1
      %p111 = por %p109, %p110
      %p112 = scmp.ne.s32.totalorder %s103, %s104
      %p113 = scmp.eq.s32.totalorder %s18, 0
      %p114 = por %p112, %p113
      %p115 = scmp.ne.s32.totalorder %s103, %s104
      %p116 = scmp.eq.s32.totalorder %s19, 1
      %p117 = por %p115, %p116
      %p119 = scmp.ne.s32.totalorder %s104, %s118
      %p120 = scmp.eq.s32.totalorder %s19, 0
      %p121 = por %p119, %p120
      %s122 = ssub.s32 %s20, %s32
      %s123 = ssub.s32 %s21, %s28
      %s124 = sor.u32 %s122, %s123
      %p125 = scmp.eq.s32.totalorder %s124, 0
      %s127 = sadd.s32 %s126, 1
      %s128 = scalar_select %p125, %s126, %s127
      %p131 = pneg %p125
      %p132 = scmp.eq.s32.totalorder %s13, 1
      %p133 = por %p131, %p132
      %p134 = scmp.ne.s32.totalorder %s126, %s129
      %p135 = scmp.eq.s32.totalorder %s13, 0
      %p136 = por %p134, %p135
      %p137 = scmp.ne.s32.totalorder %s126, %s129
      %p138 = scmp.eq.s32.totalorder %s18, 1
      %p139 = por %p137, %p138
      %p140 = scmp.ne.s32.totalorder %s129, %s130
      %p141 = scmp.eq.s32.totalorder %s18, 0
      %p142 = por %p140, %p141
      %p143 = scmp.ne.s32.totalorder %s129, %s130
      %p144 = scmp.eq.s32.totalorder %s19, 1
      %p145 = por %p143, %p144
      %p147 = scmp.ne.s32.totalorder %s130, %s146
      %p148 = scmp.eq.s32.totalorder %s19, 0
      %p149 = por %p147, %p148
      %p150 = scmp.le.s32.totalorder 1, %s13
      %p151 = scmp.lt.s32.totalorder %s13, 3
      %p152 = pnand %p150, %p151
      %p153 = pneg %p152
      // Predicated region
      $region9: #{tpu_custom_call.1} parent=5 // pred_check
        _
      $region10: #{tpu_custom_call.1} parent=5 // pred_check_branch
        %155 = sbr.rel (%p152) target = $region12
      $region11: #{tpu_custom_call.1} parent=5 // pred_region
        %s156 = ssub.s32 %s13, 1
        // Predicated region
        $region13: #{tpu_custom_call.1} parent=11 // pred_check
          %p157 = pneg %p72
        $region14: #{tpu_custom_call.1} parent=11 // pred_check_branch
          %159 = sbr.rel (%p157) target = $region16
        $region15: #{tpu_custom_call.1} parent=11 // pred_region
          _
        $region16: #{tpu_custom_call.1} parent=11 // pred_fallthru
          _
        // Predicated region
        $region17: #{tpu_custom_call.1} parent=11 // pred_check
          %p160 = pneg %p93
        $region18: #{tpu_custom_call.1} parent=11 // pred_check_branch
          %162 = sbr.rel (%p160) target = $region20
        $region19: #{tpu_custom_call.1} parent=11 // pred_region
          _
        $region20: #{tpu_custom_call.1} parent=11 // pred_fallthru
          _
        // Predicated region
        $region21: #{tpu_custom_call.1} parent=11 // pred_check
          %p163 = pneg %p114
        $region22: #{tpu_custom_call.1} parent=11 // pred_check_branch
          %165 = sbr.rel (%p163) target = $region24
        $region23: #{tpu_custom_call.1} parent=11 // pred_region
          _
        $region24: #{tpu_custom_call.1} parent=11 // pred_fallthru
          _
      $region12: #{tpu_custom_call.1} parent=5 // pred_fallthru
        _
      %p166 = scmp.lt.s32.totalorder %s13, 2
      // Predicated region
      $region25: #{tpu_custom_call.1} parent=5 // pred_check
        %p167 = pneg %p166
      $region26: #{tpu_custom_call.1} parent=5 // pred_check_branch
        %169 = sbr.rel (%p167) target = $region28
      $region27: #{tpu_custom_call.1} parent=5 // pred_region
        // Predicated region
        $region29: #{tpu_custom_call.1} parent=27 // pred_check
          %p170 = pneg %p45
        $region30: #{tpu_custom_call.1} parent=27 // pred_check_branch
          %172 = sbr.rel (%p170) target = $region32
        $region31: #{tpu_custom_call.1} parent=27 // pred_region
          %p173 = scmp.lt.s32.totalorder %s20, 1
          %s174 = scalar_select %p173, %s20, 1
          %s175 = smul.addr %s174, 4
          %s176 = scalar_lea.vmem %s0, %s175
        $region32: #{tpu_custom_call.1} parent=27 // pred_fallthru
          _
      $region28: #{tpu_custom_call.1} parent=5 // pred_fallthru
        _
      %p177 = scmp.le.s32.totalorder 1, %s13
      %p178 = scmp.lt.s32.totalorder %s13, 3
      %p179 = pnand %p177, %p178
      %p180 = pneg %p179
      // Predicated region
      $region33: #{tpu_custom_call.1} parent=5 // pred_check
        _
      $region34: #{tpu_custom_call.1} parent=5 // pred_check_branch
        %182 = sbr.rel (%p179) target = $region36
      $region35: #{tpu_custom_call.1} parent=5 // pred_region
        %s183 = ssub.s32 %s13, 1
        %p184 = scmp.lt.s32.totalorder %s22, 1
        %s185 = scalar_select %p184, %s22, 1
        %s186 = smul.addr %s185, 4
        %s187 = scalar_lea.vmem %s0, %s186
        %p188 = pneg %p51
        %p189 = pneg %p48
        %p190 = pneg %p72
        %p191 = pneg %p69
        %p192 = pneg %p93
        %p193 = pneg %p90
        %p194 = pneg %p114
        %p195 = pneg %p111
        %p196 = pneg %p142
        %p197 = pneg %p139
        %s198 = sand.u32 %s129, 1
        %s199 = scalar_lea.sflag [#allocation6], %s198
        %s200 = sand.u32 %s129, 1
        %s201 = smul.addr %s200, 8
        %s202 = scalar_lea.vmem [#allocation5], %s201
        %p203 = scmp.lt.s32.totalorder %s22, 1
        %s204 = scalar_select %p203, %s22, 1
        %s205 = smul.addr %s204, 4
        %s206 = scalar_lea.vmem %s0, %s205
        %vm208 = vcmask 7168
        %209 = vst.msk [vmem:[#allocation2] sm:$0xff] %vm208, -inf
        %210 = vst.msk [vmem:[#allocation3] sm:$0xff] %vm208, 0.0
        %vm211 = vcmask 130048
        %212 = vst.msk [vmem:[#allocation4] sm:$0xff] %vm211, 0.0
        %v213 = vld [vmem:[%s1] sm:$0xf]
        %v214 = vld [vmem:[%s1 + $0x4] sm:$0xf]
        %v215 = vld [vmem:[%s1 + $0x8] sm:$0xf]
        %v216 = vld [vmem:[%s1 + $0xc] sm:$0xf]
        %v217 = vld [vmem:[%s2] sm:$0xf]
        %v218 = vld [vmem:[%s2 + $0x4] sm:$0xf]
        %v219 = vld [vmem:[%s2 + $0x8] sm:$0xf]
        %v220 = vld [vmem:[%s2 + $0xc] sm:$0xf]
        %v221 = vld [vmem:[%s3] sm:$0xf]
        %v222 = vld [vmem:[%s3 + $0x4] sm:$0xf]
        %v223 = vld [vmem:[%s3 + $0x8] sm:$0xf]
        %v224 = vld [vmem:[%s3 + $0xc] sm:$0xf]
        %s225 = smul.u32 %s23, 8
        %s226 = sshra.s32 %s225, 3
        %s227 = sand.u32 %s225, 7
        %s228 = smul.addr %s226, 4
        %s229 = scalar_lea.vmem %s206, %s228
        %v230 = vld [vmem:[%s229] sm:$0xf]
        %v235 = vunpack.c.l.b16 %v213
        %v236 = vunpack.c.l.b16 %v214
        %v237 = vunpack.c.l.b16 %v215
        %v238 = vunpack.c.l.b16 %v216
        %v239 = vpack.c.b16 %v236, %v235
        %v240 = vpack.c.b16 %v238, %v237
        %vm243 = vcmask 261120
        %v245 = vsel %vm243, %v230, 0
        %247 = vmatprep.subr.bf16.mxu0 0
        %248 = vmatpush1.bf16.msra.mxu0 %v239
        %249 = vmatprep.subr.bf16.mxu0 0
        %250 = vmatpush1.bf16.msra.mxu0 %v240
        %251 = vmatprep.subr.bf16.mxu0 0
        %252 = vmatpush1.bf16.msra.mxu0 0
        %253 = vmatprep.subr.bf16.mxu0 0
        %254 = vmatpush1.bf16.msra.mxu0 0
        %255 = vmatprep.subr.bf16.mxu0 0
        %256 = vmatpush1.bf16.msra.mxu0 0
        %257 = vmatprep.subr.bf16.mxu0 0
        %258 = vmatpush1.bf16.msra.mxu0 0
        %259 = vmatprep.subr.bf16.mxu0 0
        %260 = vmatpush1.bf16.msra.mxu0 0
        %261 = vmatprep.subr.bf16.mxu0 0
        %262 = vmatpush1.bf16.msra.mxu0 0
        %263 = vmatprep.subr.bf16.mxu0 0
        %264 = vmatpush1.bf16.msra.mxu0 0
        %265 = vmatprep.subr.bf16.mxu0 0
        %266 = vmatpush1.bf16.msra.mxu0 0
        %267 = vmatprep.subr.bf16.mxu0 0
        %268 = vmatpush1.bf16.msra.mxu0 0
        %269 = vmatprep.subr.bf16.mxu0 0
        %270 = vmatpush1.bf16.msra.mxu0 0
        %271 = vmatprep.subr.bf16.mxu0 0
        %272 = vmatpush1.bf16.msra.mxu0 0
        %273 = vmatprep.subr.bf16.mxu0 0
        %274 = vmatpush1.bf16.msra.mxu0 0
        %275 = vmatprep.subr.bf16.mxu0 0
        %276 = vmatpush1.bf16.msra.mxu0 0
        %277 = vmatprep.subr.bf16.mxu0 0
        %278 = vmatpush1.bf16.msra.mxu0 0
        %279 = vmatprep.mubr.bf16.mxu0 0
        %280 = vmatmul.mubr.bf16.gmra.mrb[0].mxu0 %v245
        %v281 = vpop.f32.mrb[0].mxu0
        %v282 = vadd.f32 0.0, %v281
        %v283 = vpop.f32.mrb[0].mxu0
        %v284 = vpop.f32.mrb[0].mxu0
        %v285 = vpop.f32.mrb[0].mxu0
        %286 = vdwg.mxu0
        %v287 = vpack.c.bf16 %v282, %v282
        %v288 = vlaneseq
        %v289 = vshrl.u32 %v288, 7
        %v290 = vlaneseq
        %v291 = vand.u32 %v290, 127
        %vm292 = vcmp.le.s32.totalorder %v291, %v289
        %s293 = sadd.s32 %s23, 1
        // While loop
        $region37: #{tpu_custom_call.1} parent=35 // loop_pre_header
          _
        $region38: #{tpu_custom_call.1} parent=35 // loop_header
          %s295 = sphi 0, %s297
          %p296 = scmp.ge.s32.totalorder %s295, %s293
        $region39: #{tpu_custom_call.1} parent=35 // loop_header_branch
          %299 = sbr.rel (%p296) target = $region43
        $region40: #{tpu_custom_call.1} parent=35 // loop_body
          %s300 = smul.u32 %s295, 8
          %s301 = sshra.s32 %s300, 3
          %s302 = sand.u32 %s300, 7
          %s303 = smul.addr %s301, 4
          %s304 = scalar_lea.vmem %s206, %s303
          %v305 = vld [vmem:[%s304] sm:$0xf]
          %v310 = vunpack.c.l.b16 %v217
          %v311 = vunpack.c.l.b16 %v218
          %v312 = vunpack.c.l.b16 %v219
          %v313 = vunpack.c.l.b16 %v220
          %v314 = vpack.c.b16 %v311, %v310
          %v315 = vpack.c.b16 %v313, %v312
          %v319 = vsel %vm243, %v305, 0
          %321 = vmatprep.subr.bf16.mxu0 0
          %322 = vmatpush1.bf16.msra.mxu0 %v314
          %323 = vmatprep.subr.bf16.mxu0 0
          %324 = vmatpush1.bf16.msra.mxu0 %v315
          %325 = vmatprep.subr.bf16.mxu0 0
          %326 = vmatpush1.bf16.msra.mxu0 0
          %327 = vmatprep.subr.bf16.mxu0 0
          %328 = vmatpush1.bf16.msra.mxu0 0
          %329 = vmatprep.subr.bf16.mxu0 0
          %330 = vmatpush1.bf16.msra.mxu0 0
          %331 = vmatprep.subr.bf16.mxu0 0
          %332 = vmatpush1.bf16.msra.mxu0 0
          %333 = vmatprep.subr.bf16.mxu0 0
          %334 = vmatpush1.bf16.msra.mxu0 0
          %335 = vmatprep.subr.bf16.mxu0 0
          %336 = vmatpush1.bf16.msra.mxu0 0
          %337 = vmatprep.subr.bf16.mxu0 0
          %338 = vmatpush1.bf16.msra.mxu0 0
          %339 = vmatprep.subr.bf16.mxu0 0
          %340 = vmatpush1.bf16.msra.mxu0 0
          %341 = vmatprep.subr.bf16.mxu0 0
          %342 = vmatpush1.bf16.msra.mxu0 0
          %343 = vmatprep.subr.bf16.mxu0 0
          %344 = vmatpush1.bf16.msra.mxu0 0
          %345 = vmatprep.subr.bf16.mxu0 0
          %346 = vmatpush1.bf16.msra.mxu0 0
          %347 = vmatprep.subr.bf16.mxu0 0
          %348 = vmatpush1.bf16.msra.mxu0 0
          %349 = vmatprep.subr.bf16.mxu0 0
          %350 = vmatpush1.bf16.msra.mxu0 0
          %351 = vmatprep.subr.bf16.mxu0 0
          %352 = vmatpush1.bf16.msra.mxu0 0
          %353 = vmatprep.mubr.bf16.mxu0 0
          %354 = vmatmul.mubr.bf16.gmra.mrb[0].mxu0 %v319
          %v355 = vpop.f32.mrb[0].mxu0
          %v356 = vadd.f32 0.0, %v355
          %v357 = vpop.f32.mrb[0].mxu0
          %v358 = vpop.f32.mrb[0].mxu0
          %v359 = vpop.f32.mrb[0].mxu0
          %360 = vdwg.mxu0
          %v361 = vpack.c.bf16 %v356, %v356
          %v366 = vunpack.c.l.b16 %v221
          %v367 = vunpack.c.l.b16 %v222
          %v368 = vunpack.c.l.b16 %v223
          %v369 = vunpack.c.l.b16 %v224
          %v370 = vpack.c.b16 %v367, %v366
          %v371 = vpack.c.b16 %v369, %v368
          %374 = vmatprep.subr.bf16.mxu0 0
          %375 = vmatpush1.bf16.msra.mxu0 %v370
          %376 = vmatprep.subr.bf16.mxu0 0
          %377 = vmatpush1.bf16.msra.mxu0 %v371
          %378 = vmatprep.subr.bf16.mxu0 0
          %379 = vmatpush1.bf16.msra.mxu0 0
          %380 = vmatprep.subr.bf16.mxu0 0
          %381 = vmatpush1.bf16.msra.mxu0 0
          %382 = vmatprep.subr.bf16.mxu0 0
          %383 = vmatpush1.bf16.msra.mxu0 0
          %384 = vmatprep.subr.bf16.mxu0 0
          %385 = vmatpush1.bf16.msra.mxu0 0
          %386 = vmatprep.subr.bf16.mxu0 0
          %387 = vmatpush1.bf16.msra.mxu0 0
          %388 = vmatprep.subr.bf16.mxu0 0
          %389 = vmatpush1.bf16.msra.mxu0 0
          %390 = vmatprep.subr.bf16.mxu0 0
          %391 = vmatpush1.bf16.msra.mxu0 0
          %392 = vmatprep.subr.bf16.mxu0 0
          %393 = vmatpush1.bf16.msra.mxu0 0
          %394 = vmatprep.subr.bf16.mxu0 0
          %395 = vmatpush1.bf16.msra.mxu0 0
          %396 = vmatprep.subr.bf16.mxu0 0
          %397 = vmatpush1.bf16.msra.mxu0 0
          %398 = vmatprep.subr.bf16.mxu0 0
          %399 = vmatpush1.bf16.msra.mxu0 0
          %400 = vmatprep.subr.bf16.mxu0 0
          %401 = vmatpush1.bf16.msra.mxu0 0
          %402 = vmatprep.subr.bf16.mxu0 0
          %403 = vmatpush1.bf16.msra.mxu0 0
          %404 = vmatprep.subr.bf16.mxu0 0
          %405 = vmatpush1.bf16.msra.mxu0 0
          %406 = vmatprep.mubr.bf16.mxu0 0
          %407 = vmatmul.mubr.bf16.gmra.mrb[0].mxu0 %v319
          %v408 = vpop.f32.mrb[0].mxu0
          %v409 = vadd.f32 0.0, %v408
          %v410 = vpop.f32.mrb[0].mxu0
          %v411 = vpop.f32.mrb[0].mxu0
          %v412 = vpop.f32.mrb[0].mxu0
          %413 = vdwg.mxu0
          %v414 = vpack.c.bf16 %v409, %v409
          %v416 = vsel %vm211, %v287, 0
          %v419 = vsel %vm211, %v361, 0
          %421 = vmatprep.subr.bf16.mxu0 0
          %422 = vmatpush1.bf16.xpose.msra.mxu0 %v419
          %423 = vmatprep.subr.bf16.mxu0 0
          %424 = vmatpush1.bf16.xpose.msra.mxu0 0
          %425 = vmatprep.subr.bf16.mxu0 0
          %426 = vmatpush1.bf16.xpose.msra.mxu0 0
          %427 = vmatprep.subr.bf16.mxu0 0
          %428 = vmatpush1.bf16.xpose.msra.mxu0 0
          %429 = vmatprep.subr.bf16.mxu0 0
          %430 = vmatpush1.bf16.xpose.msra.mxu0 0
          %431 = vmatprep.subr.bf16.mxu0 0
          %432 = vmatpush1.bf16.xpose.msra.mxu0 0
          %433 = vmatprep.subr.bf16.mxu0 0
          %434 = vmatpush1.bf16.xpose.msra.mxu0 0
          %435 = vmatprep.subr.bf16.mxu0 0
          %436 = vmatpush1.bf16.xpose.msra.mxu0 0
          %437 = vmatprep.subr.bf16.mxu0 0
          %438 = vmatpush1.bf16.xpose.msra.mxu0 0
          %439 = vmatprep.subr.bf16.mxu0 0
          %440 = vmatpush1.bf16.xpose.msra.mxu0 0
          %441 = vmatprep.subr.bf16.mxu0 0
          %442 = vmatpush1.bf16.xpose.msra.mxu0 0
          %443 = vmatprep.subr.bf16.mxu0 0
          %444 = vmatpush1.bf16.xpose.msra.mxu0 0
          %445 = vmatprep.subr.bf16.mxu0 0
          %446 = vmatpush1.bf16.xpose.msra.mxu0 0
          %447 = vmatprep.subr.bf16.mxu0 0
          %448 = vmatpush1.bf16.xpose.msra.mxu0 0
          %449 = vmatprep.subr.bf16.mxu0 0
          %450 = vmatpush1.bf16.xpose.msra.mxu0 0
          %451 = vmatprep.subr.bf16.mxu0 0
          %452 = vmatpush1.bf16.xpose.msra.mxu0 0
          %453 = vmatprep.mubr.bf16.mxu0 0
          %454 = vmatmul.mubr.bf16.gmra.mrb[0].mxu0 %v416
          %v455 = vpop.f32.mrb[0].mxu0
          %v456 = vadd.f32 0.0, %v455
          %v457 = vpop.f32.mrb[0].mxu0
          %v458 = vpop.f32.mrb[0].mxu0
          %v459 = vpop.f32.mrb[0].mxu0
          %460 = vdwg.mxu0
          %p461 = scmp.lt.s32.totalorder %s295, %s23
          %s462 = scalar_select %p461, 1, 0
          %v463 = vstv %s462
          %vm464 = vcmp.eq.s32.totalorder %v463, 1
          %vm465 = vmor %vm292, %vm464
          %v466 = vsel %vm465, %v456, -inf
          %v467 = vld [vmem:[#allocation2] sm:$0xff]
          %vm468 = vcmask 64512
          %v469 = vsel %vm468, %v466, -inf
          %470 = vmax.xlane.f32.xlu0 %v469
          %v471 = vpop.xlane.xlu0 %470
          %v472 = vmax.f32 %v467, %v471
          %v473 = vsub.f32 %v467, %v472
          %v474 = vmul.f32 %v473, 1.442695
          %v475 = vpow.pop %v474
          %477 = vset.pattern.permute.xlu0 0
          %478 = vperm.xlu0 %477, %v472
          %v479 = vpop.permute.xlu0 %478
          %v481 = vsub.f32 %v466, %v479
          %v482 = vmul.f32 %v481, 1.442695
          %v483 = vpow.pop %v482
          %v484 = vld [vmem:[#allocation3] sm:$0xff]
          %v485 = vmul.f32 %v475, %v484
          %v486 = vsel %vm468, %v483, 0.0
          %487 = vadd.xlane.f32.xlu0 %v486
          %v488 = vpop.xlane.xlu0 %487
          %v489 = vadd.f32 %v485, %v488
          %490 = vst.msk [vmem:[#allocation3] sm:$0xff] %vm208, %v489
          %v491 = vld [vmem:[#allocation4] sm:$0xff]
          %493 = vset.pattern.permute.xlu0 0
          %494 = vperm.xlu0 %493, %v475
          %v495 = vpop.permute.xlu0 %494
          %v497 = vmul.f32 %v495, %v491
          %v498 = vpack.c.bf16 %v483, %v483
          %v500 = vsel %vm468, %v498, 0
          %vm502 = vcmask 1043456
          %v504 = vsel %vm502, %v414, 0
          %506 = vmatprep.subr.bf16.mxu0 0
          %507 = vmatpush1.bf16.msra.mxu0 %v504
          %508 = vmatprep.subr.bf16.mxu0 0
          %509 = vmatpush1.bf16.msra.mxu0 0
          %510 = vmatprep.subr.bf16.mxu0 0
          %511 = vmatpush1.bf16.msra.mxu0 0
          %512 = vmatprep.subr.bf16.mxu0 0
          %513 = vmatpush1.bf16.msra.mxu0 0
          %514 = vmatprep.subr.bf16.mxu0 0
          %515 = vmatpush1.bf16.msra.mxu0 0
          %516 = vmatprep.subr.bf16.mxu0 0
          %517 = vmatpush1.bf16.msra.mxu0 0
          %518 = vmatprep.subr.bf16.mxu0 0
          %519 = vmatpush1.bf16.msra.mxu0 0
          %520 = vmatprep.subr.bf16.mxu0 0
          %521 = vmatpush1.bf16.msra.mxu0 0
          %522 = vmatprep.subr.bf16.mxu0 0
          %523 = vmatpush1.bf16.msra.mxu0 0
          %524 = vmatprep.subr.bf16.mxu0 0
          %525 = vmatpush1.bf16.msra.mxu0 0
          %526 = vmatprep.subr.bf16.mxu0 0
          %527 = vmatpush1.bf16.msra.mxu0 0
          %528 = vmatprep.subr.bf16.mxu0 0
          %529 = vmatpush1.bf16.msra.mxu0 0
          %530 = vmatprep.subr.bf16.mxu0 0
          %531 = vmatpush1.bf16.msra.mxu0 0
          %532 = vmatprep.subr.bf16.mxu0 0
          %533 = vmatpush1.bf16.msra.mxu0 0
          %534 = vmatprep.subr.bf16.mxu0 0
          %535 = vmatpush1.bf16.msra.mxu0 0
          %536 = vmatprep.subr.bf16.mxu0 0
          %537 = vmatpush1.bf16.msra.mxu0 0
          %538 = vmatprep.mubr.bf16.mxu0 0
          %539 = vmatmul.mubr.bf16.gmra.mrb[0].mxu0 %v500
          %v540 = vpop.f32.mrb[0].mxu0
          %v541 = vadd.f32 0.0, %v540
          %v542 = vpop.f32.mrb[0].mxu0
          %v543 = vpop.f32.mrb[0].mxu0
          %v544 = vpop.f32.mrb[0].mxu0
          %545 = vdwg.mxu0
          %v546 = vadd.f32 %v497, %v541
          %547 = vst.msk [vmem:[#allocation4] sm:$0xff] %vm211, %v546
          %548 = vst.msk [vmem:[#allocation2] sm:$0xff] %vm208, %v472
        $region41: #{tpu_custom_call.1} parent=35 // loop_footer
          %s297 = sadd.s32 %s295, 1
        $region42: #{tpu_custom_call.1} parent=35 // loop_footer_branch
          %294 = sbr.rel target = $region38
        $region43: #{tpu_custom_call.1} parent=35 // loop_exit
          _
        %v549 = vld [vmem:[#allocation4] sm:$0xff]
        %v550 = vld [vmem:[#allocation3] sm:$0xff]
        %552 = vset.pattern.permute.xlu0 0
        %553 = vperm.xlu0 %552, %v550
        %v554 = vpop.permute.xlu0 %553
        %v556 = vrcp.pop %v554
        %v557 = vmul.f32 %v549, %v556
        %558 = vst.msk [vmem:[%s202] sm:$0xff] %vm211, %v557
        %s559 = sand.u32 %s129, 1
        %s560 = scalar_lea.sflag [#allocation6], %s559
        %s561 = sand.u32 %s129, 1
        %s562 = smul.addr %s561, 8
        %s563 = scalar_lea.vmem [#allocation5], %s562
        // Predicated region
        $region44: #{tpu_custom_call.1} parent=35 // pred_check
          %p564 = pneg %p139
        $region45: #{tpu_custom_call.1} parent=35 // pred_check_branch
          %566 = sbr.rel (%p564) target = $region47
        $region46: #{tpu_custom_call.1} parent=35 // pred_region
          %s568 = ssub.s32 128, 128
          %569 = vsyncadd %s560, %s568
          %s570 = sadd.s32 %s23, %s22
          %s571 = smul.addr %s570, 128
          %s572 = scalar_lea.hbm %s4, %s571
          %s574 = sshll.u32 %s563, 4
          %s575 = int_to_ptr.vmem [resolvable:$true] %s574
          %577 = dma.vmem_to_hbm [thread:$0]  %s575, 128, %s572, %s560
        $region47: #{tpu_custom_call.1} parent=35 // pred_fallthru
          _
      $region36: #{tpu_custom_call.1} parent=5 // pred_fallthru
        _
      %p578 = scmp.le.s32.totalorder 2, %s13
      // Predicated region
      $region48: #{tpu_custom_call.1} parent=5 // pred_check
        %p579 = pneg %p578
      $region49: #{tpu_custom_call.1} parent=5 // pred_check_branch
        %581 = sbr.rel (%p579) target = $region51
      $region50: #{tpu_custom_call.1} parent=5 // pred_region
        %s582 = ssub.s32 %s13, 2
        // Predicated region
        $region52: #{tpu_custom_call.1} parent=50 // pred_check
          %p583 = pneg %p145
        $region53: #{tpu_custom_call.1} parent=50 // pred_check_branch
          %585 = sbr.rel (%p583) target = $region55
        $region54: #{tpu_custom_call.1} parent=50 // pred_region
          %s586 = sand.u32 %s130, 1
          %s587 = scalar_lea.sflag [#allocation6], %s586
          %s588 = sand.u32 %s130, 1
          %s589 = smul.addr %s588, 8
          %s590 = scalar_lea.vmem [#allocation5], %s589
          %591 = dma.done %s587, 128
        $region55: #{tpu_custom_call.1} parent=50 // pred_fallthru
          _
      $region51: #{tpu_custom_call.1} parent=5 // pred_fallthru
        _
    $region6: #{tpu_custom_call.1} parent=1 // loop_footer
      %s17 = sadd.s32 1, %s13
    $region7: #{tpu_custom_call.1} parent=1 // loop_footer_branch
      %12 = sbr.rel target = $region3
    $region8: #{tpu_custom_call.1} parent=1 // loop_exit
      _
    %592 = vsyncpa [#allocation6], 1
    %s593 = scalar_lea.sflag [#allocation6], 1
    %594 = vsyncpa %s593, 1

</llo_original>
